<compile_context>
chip_gen: v6e
topology: v6e:2x2x1
jax: 0.10.0
libtpu: 0.0.40
codegen_flags: <defaults>
</compile_context>

<pallas_src>
import jax
import jax.numpy as jnp
from jax.experimental import pallas as pl
from jax.experimental.pallas import tpu as pltpu


# ----------------------------- activations ---------------------------------
def _apply_act(x, act):
    if act == "ReLU":
        return jnp.maximum(x, 0.0)
    if act == "LeakyReLU":
        return jnp.where(x >= 0, x, 0.01 * x)
    if act == "tanh":
        return jnp.tanh(x)
    return x  # None -> identity


# ------------------------- in-kernel helper math ----------------------------
def _bn_act(y, gamma, beta, act, eps, groups=1):
    """BatchNorm over rows (batch*spatial) per channel, two-pass stats in f32.

    groups=2 handles the paired-height layout where columns are
    [C channels @ even h | C channels @ odd h]: stats are folded across both
    column halves (they are the same channels at different spatial positions).
    """
    rows, cols = y.shape
    n = rows * groups
    s1 = jnp.sum(y, axis=0, keepdims=True)                      # (1, cols)
    if groups == 2:
        c = cols // 2
        s1 = s1[:, :c] + s1[:, c:]
    mean = s1 * (1.0 / n)
    if groups == 2:
        mean = jnp.concatenate([mean, mean], axis=-1)
    d = y - mean
    s2 = jnp.sum(d * d, axis=0, keepdims=True)                  # two-pass variance
    if groups == 2:
        c = cols // 2
        s2 = s2[:, :c] + s2[:, c:]
    var = s2 * (1.0 / n)                                        # biased var (PyTorch BN)
    if groups == 2:
        var = jnp.concatenate([var, var], axis=-1)
    y_hat = d * jax.lax.rsqrt(var + eps)                        # rsqrt -> EUP slot
    return _apply_act(y_hat * gamma + beta, act)


# ----------------------------- fused Pallas kernel ---------------------------
def _make_fused_kernel(n_blocks, act, eps):
    n_scr = max(n_blocks - 2, 0)   # one VMEM scratch per inter-block re-pairing

    def kernel(*refs):
        if n_scr:
            in_refs = refs[:-1 - n_scr]
            o_ref = refs[-1 - n_scr]
            scratches = refs[-n_scr:]
        else:
            in_refs = refs[:-1]
            o_ref = refs[-1]
            scratches = ()

        idx = 0
        x = in_refs[idx][...]                    # (B*H/2, 2*Cin*W), bf16, paired heights
        idx += 1

        # ---- block 0: width-reduction conv (1, W) as block-diag matmul + BN + act ----
        w0 = in_refs[idx][...]                   # (2*Cin*W, 2*C0), bf16, block-diagonal
        g0 = in_refs[idx + 1][...]               # (1, 2*C0) f32 (pre-tiled)
        b0 = in_refs[idx + 2][...]
        idx += 3
        y = jnp.dot(x, w0, preferred_element_type=jnp.float32)   # (B*H/2, 2*C0) f32
        y = _bn_act(y, g0, b0, act, eps, groups=2)

        # ---- hr (height-halving conv) + ce (1x1 expansion) blocks ----
        for b in range(1, n_blocks):
            hr_w = in_refs[idx][...]             # (2*Cin, Cin) bf16  = vstack(W_kh0, W_kh1)
            hr_g = in_refs[idx + 1][...]
            hr_b = in_refs[idx + 2][...]
            ce_w = in_refs[idx + 3][...]         # (Cin, Cout) bf16
            ce_g = in_refs[idx + 4][...]
            ce_b = in_refs[idx + 5][...]
            idx += 6

            # single merged matmul: paired input [even|odd] x vstack([W_kh0, W_kh1])
            y = jnp.dot(y.astype(jnp.bfloat16), hr_w,
                        preferred_element_type=jnp.float32)
            y = _bn_act(y, hr_g, hr_b, act, eps)
            y = jnp.dot(y.astype(jnp.bfloat16), ce_w,
                        preferred_element_type=jnp.float32)
            y = _bn_act(y, ce_g, ce_b, act, eps)

            # re-pair adjacent heights for the next hr block: stage in VMEM scratch and
            # pull even/odd rows with strided sublane reads (no MXU selection matmuls).
            if b < n_blocks - 1:
                scr = scratches[b - 1]
                scr[...] = y
                rh = y.shape[0] // 2
                y_even = scr[pl.ds(0, rh, stride=2), :]
                y_odd = scr[pl.ds(1, rh, stride=2), :]
                y = jnp.concatenate([y_even, y_odd], axis=-1)    # (rows/2, 2*Cout)

        # ---- FC head (final h == 1, so y is (B, c_last)) ----
        fc1_w = in_refs[idx][...]                # (c_last, 128) bf16
        fc1_b = in_refs[idx + 1][...]            # (1, 128) f32
        fc2_w = in_refs[idx + 2][...]            # (1, 128) f32 row
        fc2_b = in_refs[idx + 3][...]            # (1, 1)  f32
        y = _apply_act(jnp.dot(y.astype(jnp.bfloat16), fc1_w,
                               preferred_element_type=jnp.float32) + fc1_b, act)
        # fc2 with N=1: VPU multiply + lane reduction instead of an MXU matmul
        o_ref[...] = jnp.sum(y * fc2_w, axis=-1, keepdims=True) + fc2_b

    return kernel


def _full_spec(shape):
    zeros = (0,) * len(shape)
    return pl.BlockSpec(shape, lambda i: zeros)


# ----------------------------- parameter init -------------------------------
# Matmul weights stored PRE-TRANSPOSED and in bf16 (MXU-native):
#   block0 w : (Cin*W, C0)      [row = ci*W + wi]
#   hr_w     : (2*Cin, Cin)     [row kh*Cin + i, col o]  = torch_w[o, i, kh, 0]
#   ce_w     : (Cin, Cout)
#   fc1_w    : (c_last, 128)
#   fc2_w    : (1, 128) f32 row (applied on the VPU, not the MXU)
# BN gammas/betas and fc biases stay f32 as (1, C) rows.
def init_params(key, in_width, channel_counts_in, channel_counts_out):
    n_blocks = len(channel_counts_in)
    keys = iter(jax.random.split(key, 4 * n_blocks + 4))
    params = {"blocks": []}

    cin0 = channel_counts_in[0]
    c0 = channel_counts_out[0]
    fan0 = cin0 * in_width
    w0 = jax.random.normal(next(keys), (cin0 * in_width, c0), jnp.float32) / jnp.sqrt(fan0)
    params["blocks"].append({
        "type": "width",
        "w": w0.astype(jnp.bfloat16),
        "gamma": jnp.ones((1, c0), jnp.float32),
        "beta": jnp.zeros((1, c0), jnp.float32),
    })
    for b in range(1, n_blocks):
        cin = channel_counts_in[b]
        cout = channel_counts_out[b]
        hr = jax.random.normal(next(keys), (2 * cin, cin), jnp.float32) / jnp.sqrt(2.0 * cin)
        ce = jax.random.normal(next(keys), (cin, cout), jnp.float32) / jnp.sqrt(1.0 * cin)
        params["blocks"].append({
            "type": "hr",
            "hr_w": hr.astype(jnp.bfloat16),
            "hr_gamma": jnp.ones((1, cin), jnp.float32),
            "hr_beta": jnp.zeros((1, cin), jnp.float32),
            "ce_w": ce.astype(jnp.bfloat16),
            "ce_gamma": jnp.ones((1, cout), jnp.float32),
            "ce_beta": jnp.zeros((1, cout), jnp.float32),
        })
    c_last = channel_counts_out[-1]
    params["fc1_w"] = (jax.random.normal(next(keys), (c_last, 128), jnp.float32)
                       / jnp.sqrt(1.0 * c_last)).astype(jnp.bfloat16)
    params["fc1_b"] = jnp.zeros((1, 128), jnp.float32)
    params["fc2_w"] = (jax.random.normal(next(keys), (1, 128), jnp.float32)
                       / jnp.sqrt(128.0))
    params["fc2_b"] = jnp.zeros((1, 1), jnp.float32)
    return params


# ----------------------------- pallas forward --------------------------------
def forward_pallas(params, x, act, eps=1e-5):
    B, Cin, H, W = x.shape  # NCHW, Cin == 2
    n_blocks = len(params["blocks"])

    # Wrapper-side (free) layout work:
    #  * pair adjacent heights into the lane axis: rows=(b, h-pair), cols=[even | odd] (ci,wi)
    #  * build the block-diagonal block-0 weight so the first pairing costs nothing in-kernel
    #  * cast matmul operands to bf16
    x2d = (jnp.transpose(x, (0, 2, 1, 3))                # (B, H, Cin, W)
           .reshape(B * (H // 2), 2 * Cin * W)
           .astype(jnp.bfloat16))
    blk0 = params["blocks"][0]
    w0_bd = jnp.kron(jnp.eye(2, dtype=blk0["w"].dtype), blk0["w"])   # (2*Cin*W, 2*C0)
    g0 = jnp.concatenate([blk0["gamma"], blk0["gamma"]], axis=-1)    # pre-tiled for paired layout
    b0 = jnp.concatenate([blk0["beta"], blk0["beta"]], axis=-1)

    inputs = [x2d, w0_bd, g0, b0]
    for blk in params["blocks"][1:]:
        inputs += [blk["hr_w"], blk["hr_gamma"], blk["hr_beta"],
                   blk["ce_w"], blk["ce_gamma"], blk["ce_beta"]]
    inputs += [params["fc1_w"], params["fc1_b"], params["fc2_w"], params["fc2_b"]]

    # one f32 VMEM scratch per inter-block re-pairing boundary (after block b's ce, b>=1)
    scratch_shapes = []
    for b in range(1, n_blocks - 1):
        rows = (B * H) // (2 ** b)
        cout = params["blocks"][b]["ce_gamma"].shape[1]
        scratch_shapes.append(pltpu.VMEM((rows, cout), jnp.float32))

    kernel = _make_fused_kernel(n_blocks, act, eps)
    # NOTE (review items 5/6): at B=4 the whole net fits one TensorCore and N<=32 lanes; for
    # scaled-up configs, add a "parallel" leading grid axis over batch (with a cross-core BN
    # reduction) and batch problems into the lane axis so every matmul presents N>=128.
    return pl.pallas_call(
        kernel,
        grid=(1,),
        in_specs=[_full_spec(a.shape) for a in inputs],
        out_specs=pl.BlockSpec((B, 1), lambda i: (0, 0)),
        out_shape=jax.ShapeDtypeStruct((B, 1), jnp.float32),
        scratch_shapes=scratch_shapes,
        compiler_params=pltpu.CompilerParams(
            dimension_semantics=("arbitrary",),
            vmem_limit_bytes=16 * 1024 * 1024,   # working set is a few KB; safe on v7x 64 MiB
        ),
    )(*inputs)


# ----------------------------- pure-JAX reference ----------------------------
def forward_ref(params, x, act, eps=1e-5):
    def conv(x, w, stride):
        return jax.lax.conv_general_dilated(
            x, w, window_strides=stride, padding="VALID",
            dimension_numbers=("NCHW", "OIHW", "NCHW"))

    def bn(y, gamma, beta):
        mean = jnp.mean(y, axis=(0, 2, 3), keepdims=True)
        var = jnp.mean((y - mean) ** 2, axis=(0, 2, 3), keepdims=True)
        g = gamma.reshape(-1)
        b = beta.reshape(-1)
        return ((y - mean) * jax.lax.rsqrt(var + eps)
                * g[None, :, None, None] + b[None, :, None, None])

    B, Cin, H, W = x.shape
    blk = params["blocks"][0]
    w0 = blk["w"].astype(jnp.float32)
    c0 = w0.shape[1]
    w0_oihw = w0.T.reshape(c0, Cin, 1, W)
    y = _apply_act(bn(conv(x, w0_oihw, (1, 1)), blk["gamma"], blk["beta"]), act)
    for blk in params["blocks"][1:]:
        hr = blk["hr_w"].astype(jnp.float32)                          # (2*Cin, Cin)
        cin = hr.shape[1]
        hr_oihw = jnp.transpose(hr.reshape(2, cin, cin), (2, 1, 0))[..., None]   # (O,I,2,1)
        y = _apply_act(bn(conv(y, hr_oihw, (2, 1)), blk["hr_gamma"], blk["hr_beta"]), act)
        ce_oihw = blk["ce_w"].astype(jnp.float32).T[..., None, None]  # (O,I,1,1)
        y = _apply_act(bn(conv(y, ce_oihw, (1, 1)), blk["ce_gamma"], blk["ce_beta"]), act)
    y = y.reshape(y.shape[0], -1)
    y = _apply_act(y @ params["fc1_w"].astype(jnp.float32) + params["fc1_b"], act)
    return y @ params["fc2_w"].astype(jnp.float32).T + params["fc2_b"]


# ----------------------------------- main ------------------------------------
if __name__ == "__main__":
    # small config consistent with the module's forward
    batch = 4
    in_width = 8
    heights_in = [4, 4, 2]
    heights_out = [4, 2, 1]
    channel_counts_in = [2, 8, 16]
    channel_counts_out = [8, 16, 32]
    non_lin = "ReLU"

    key = jax.random.PRNGKey(0)
    k_param, k_x = jax.random.split(key)
    params = init_params(k_param, in_width, channel_counts_in, channel_counts_out)
    x = jax.random.normal(k_x, (batch, 2, heights_in[0], in_width), jnp.float32)

    out = jax.block_until_ready(forward_pallas(params, x, non_lin))
    assert out.shape == (batch, 1), out.shape

    ref = jax.block_until_ready(forward_ref(params, x, non_lin))
    # Tolerance re-verified for bf16 MXU operands vs. the f32 reference (review note #2).
    assert jnp.allclose(out, ref, atol=5e-2, rtol=5e-2), (out, ref)

    print("KERNEL_OK")
</pallas_src>

<mosaic_0001>
module attributes {stable_mosaic.version = 11 : i64} {
  func.func @kernel(%arg0: i32, %arg1: memref<8x32xbf16, #tpu.memory_space<vmem>>, %arg2: memref<32x16xbf16, #tpu.memory_space<vmem>>, %arg3: memref<1x16xf32, #tpu.memory_space<vmem>>, %arg4: memref<1x16xf32, #tpu.memory_space<vmem>>, %arg5: memref<16x8xbf16, #tpu.memory_space<vmem>>, %arg6: memref<1x8xf32, #tpu.memory_space<vmem>>, %arg7: memref<1x8xf32, #tpu.memory_space<vmem>>, %arg8: memref<8x16xbf16, #tpu.memory_space<vmem>>, %arg9: memref<1x16xf32, #tpu.memory_space<vmem>>, %arg10: memref<1x16xf32, #tpu.memory_space<vmem>>, %arg11: memref<32x16xbf16, #tpu.memory_space<vmem>>, %arg12: memref<1x16xf32, #tpu.memory_space<vmem>>, %arg13: memref<1x16xf32, #tpu.memory_space<vmem>>, %arg14: memref<16x32xbf16, #tpu.memory_space<vmem>>, %arg15: memref<1x32xf32, #tpu.memory_space<vmem>>, %arg16: memref<1x32xf32, #tpu.memory_space<vmem>>, %arg17: memref<32x128xbf16, #tpu.memory_space<vmem>>, %arg18: memref<1x128xf32, #tpu.memory_space<vmem>>, %arg19: memref<1x128xf32, #tpu.memory_space<vmem>>, %arg20: memref<1x1xf32, #tpu.memory_space<vmem>>, %arg21: memref<4x1xf32, #tpu.memory_space<vmem>>, %arg22: memref<8x16xf32, #tpu.memory_space<vmem>>) attributes {dimension_semantics = [#tpu.dimension_semantics<arbitrary>], iteration_bounds = array<i64: 1>, scalar_prefetch = 0 : i64, scratch_operands = 1 : i64, tpu.core_type = #tpu.core_type<tc>, window_params = [{pipeline_mode = #tpu.pipeline_mode<synchronous>, transform_indices = @transform_0, window_bounds = array<i64: 8, 32>}, {pipeline_mode = #tpu.pipeline_mode<synchronous>, transform_indices = @transform_1, window_bounds = array<i64: 32, 16>}, {pipeline_mode = #tpu.pipeline_mode<synchronous>, transform_indices = @transform_2, window_bounds = array<i64: 1, 16>}, {pipeline_mode = #tpu.pipeline_mode<synchronous>, transform_indices = @transform_3, window_bounds = array<i64: 1, 16>}, {pipeline_mode = #tpu.pipeline_mode<synchronous>, transform_indices = @transform_4, window_bounds = array<i64: 16, 8>}, {pipeline_mode = #tpu.pipeline_mode<synchronous>, transform_indices = @transform_5, window_bounds = array<i64: 1, 8>}, {pipeline_mode = #tpu.pipeline_mode<synchronous>, transform_indices = @transform_6, window_bounds = array<i64: 1, 8>}, {pipeline_mode = #tpu.pipeline_mode<synchronous>, transform_indices = @transform_7, window_bounds = array<i64: 8, 16>}, {pipeline_mode = #tpu.pipeline_mode<synchronous>, transform_indices = @transform_8, window_bounds = array<i64: 1, 16>}, {pipeline_mode = #tpu.pipeline_mode<synchronous>, transform_indices = @transform_9, window_bounds = array<i64: 1, 16>}, {pipeline_mode = #tpu.pipeline_mode<synchronous>, transform_indices = @transform_10, window_bounds = array<i64: 32, 16>}, {pipeline_mode = #tpu.pipeline_mode<synchronous>, transform_indices = @transform_11, window_bounds = array<i64: 1, 16>}, {pipeline_mode = #tpu.pipeline_mode<synchronous>, transform_indices = @transform_12, window_bounds = array<i64: 1, 16>}, {pipeline_mode = #tpu.pipeline_mode<synchronous>, transform_indices = @transform_13, window_bounds = array<i64: 16, 32>}, {pipeline_mode = #tpu.pipeline_mode<synchronous>, transform_indices = @transform_14, window_bounds = array<i64: 1, 32>}, {pipeline_mode = #tpu.pipeline_mode<synchronous>, transform_indices = @transform_15, window_bounds = array<i64: 1, 32>}, {pipeline_mode = #tpu.pipeline_mode<synchronous>, transform_indices = @transform_16, window_bounds = array<i64: 32, 128>}, {pipeline_mode = #tpu.pipeline_mode<synchronous>, transform_indices = @transform_17, window_bounds = array<i64: 1, 128>}, {pipeline_mode = #tpu.pipeline_mode<synchronous>, transform_indices = @transform_18, window_bounds = array<i64: 1, 128>}, {pipeline_mode = #tpu.pipeline_mode<synchronous>, transform_indices = @transform_19, window_bounds = array<i64: 1, 1>}, {pipeline_mode = #tpu.pipeline_mode<synchronous>, transform_indices = @transform_20, window_bounds = array<i64: 4, 1>}]} {
    %c0 = arith.constant 0 : index
    %c0_0 = arith.constant 0 : index
    %0 = vector.load %arg1[%c0, %c0_0] : memref<8x32xbf16, #tpu.memory_space<vmem>>, vector<8x32xbf16>
    %c0_1 = arith.constant 0 : index
    %c0_2 = arith.constant 0 : index
    %1 = vector.load %arg2[%c0_1, %c0_2] : memref<32x16xbf16, #tpu.memory_space<vmem>>, vector<32x16xbf16>
    %c0_3 = arith.constant 0 : index
    %c0_4 = arith.constant 0 : index
    %2 = vector.load %arg3[%c0_3, %c0_4] : memref<1x16xf32, #tpu.memory_space<vmem>>, vector<1x16xf32>
    %c0_5 = arith.constant 0 : index
    %c0_6 = arith.constant 0 : index
    %3 = vector.load %arg4[%c0_5, %c0_6] : memref<1x16xf32, #tpu.memory_space<vmem>>, vector<1x16xf32>
    %cst = arith.constant dense<0.000000e+00> : vector<8x16xf32>
    %4 = tpu.matmul %0, %1, %cst {dimension_numbers = #tpu.dot_dimension_numbers<[1], [0], [0], [1], [0, 0, 1, 1], [], []>} : vector<8x32xbf16>, vector<32x16xbf16>, vector<8x16xf32> -> vector<8x16xf32>
    %cst_7 = arith.constant dense<0.000000e+00> : vector<16xf32>
    %5 = vector.multi_reduction <add>, %4, %cst_7 [0] : vector<8x16xf32> to vector<16xf32>
    %6 = vector.shape_cast %5 : vector<16xf32> to vector<1x16xf32>
    %7 = vector.extract_strided_slice %6 {offsets = [0, 0], sizes = [1, 8], strides = [1, 1]} : vector<1x16xf32> to vector<1x8xf32>
    %8 = vector.extract_strided_slice %6 {offsets = [0, 8], sizes = [1, 8], strides = [1, 1]} : vector<1x16xf32> to vector<1x8xf32>
    %9 = arith.addf %7, %8 : vector<1x8xf32>
    %cst_8 = arith.constant 6.250000e-02 : f32
    %10 = vector.broadcast %cst_8 : f32 to vector<1x8xf32>
    %11 = arith.mulf %9, %10 : vector<1x8xf32>
    %12 = tpu.concatenate %11, %11 in 1 : vector<1x8xf32>, vector<1x8xf32> -> vector<1x16xf32>
    %13 = vector.broadcast %12 : vector<1x16xf32> to vector<8x16xf32>
    %14 = arith.subf %4, %13 : vector<8x16xf32>
    %15 = arith.mulf %14, %14 : vector<8x16xf32>
    %cst_9 = arith.constant dense<0.000000e+00> : vector<16xf32>
    %16 = vector.multi_reduction <add>, %15, %cst_9 [0] : vector<8x16xf32> to vector<16xf32>
    %17 = vector.shape_cast %16 : vector<16xf32> to vector<1x16xf32>
    %18 = vector.extract_strided_slice %17 {offsets = [0, 0], sizes = [1, 8], strides = [1, 1]} : vector<1x16xf32> to vector<1x8xf32>
    %19 = vector.extract_strided_slice %17 {offsets = [0, 8], sizes = [1, 8], strides = [1, 1]} : vector<1x16xf32> to vector<1x8xf32>
    %20 = arith.addf %18, %19 : vector<1x8xf32>
    %cst_10 = arith.constant 6.250000e-02 : f32
    %21 = vector.broadcast %cst_10 : f32 to vector<1x8xf32>
    %22 = arith.mulf %20, %21 : vector<1x8xf32>
    %23 = tpu.concatenate %22, %22 in 1 : vector<1x8xf32>, vector<1x8xf32> -> vector<1x16xf32>
    %cst_11 = arith.constant 9.99999974E-6 : f32
    %24 = vector.broadcast %cst_11 : f32 to vector<1x16xf32>
    %25 = arith.addf %23, %24 : vector<1x16xf32>
    %26 = math.rsqrt %25 : vector<1x16xf32>
    %27 = vector.broadcast %26 : vector<1x16xf32> to vector<8x16xf32>
    %28 = arith.mulf %14, %27 : vector<8x16xf32>
    %29 = vector.broadcast %2 : vector<1x16xf32> to vector<8x16xf32>
    %30 = arith.mulf %28, %29 : vector<8x16xf32>
    %31 = vector.broadcast %3 : vector<1x16xf32> to vector<8x16xf32>
    %32 = arith.addf %30, %31 : vector<8x16xf32>
    %cst_12 = arith.constant 0.000000e+00 : f32
    %33 = vector.broadcast %cst_12 : f32 to vector<8x16xf32>
    %34 = arith.maximumf %32, %33 : vector<8x16xf32>
    %c0_13 = arith.constant 0 : index
    %c0_14 = arith.constant 0 : index
    %35 = vector.load %arg5[%c0_13, %c0_14] : memref<16x8xbf16, #tpu.memory_space<vmem>>, vector<16x8xbf16>
    %c0_15 = arith.constant 0 : index
    %c0_16 = arith.constant 0 : index
    %36 = vector.load %arg6[%c0_15, %c0_16] : memref<1x8xf32, #tpu.memory_space<vmem>>, vector<1x8xf32>
    %c0_17 = arith.constant 0 : index
    %c0_18 = arith.constant 0 : index
    %37 = vector.load %arg7[%c0_17, %c0_18] : memref<1x8xf32, #tpu.memory_space<vmem>>, vector<1x8xf32>
    %c0_19 = arith.constant 0 : index
    %c0_20 = arith.constant 0 : index
    %38 = vector.load %arg8[%c0_19, %c0_20] : memref<8x16xbf16, #tpu.memory_space<vmem>>, vector<8x16xbf16>
    %c0_21 = arith.constant 0 : index
    %c0_22 = arith.constant 0 : index
    %39 = vector.load %arg9[%c0_21, %c0_22] : memref<1x16xf32, #tpu.memory_space<vmem>>, vector<1x16xf32>
    %c0_23 = arith.constant 0 : index
    %c0_24 = arith.constant 0 : index
    %40 = vector.load %arg10[%c0_23, %c0_24] : memref<1x16xf32, #tpu.memory_space<vmem>>, vector<1x16xf32>
    %41 = arith.truncf %34 : vector<8x16xf32> to vector<8x16xbf16>
    %cst_25 = arith.constant dense<0.000000e+00> : vector<8x8xf32>
    %42 = tpu.matmul %41, %35, %cst_25 {dimension_numbers = #tpu.dot_dimension_numbers<[1], [0], [0], [1], [0, 0, 1, 1], [], []>} : vector<8x16xbf16>, vector<16x8xbf16>, vector<8x8xf32> -> vector<8x8xf32>
    %cst_26 = arith.constant dense<0.000000e+00> : vector<8xf32>
    %43 = vector.multi_reduction <add>, %42, %cst_26 [0] : vector<8x8xf32> to vector<8xf32>
    %44 = vector.shape_cast %43 : vector<8xf32> to vector<1x8xf32>
    %cst_27 = arith.constant 1.250000e-01 : f32
    %45 = vector.broadcast %cst_27 : f32 to vector<1x8xf32>
    %46 = arith.mulf %44, %45 : vector<1x8xf32>
    %47 = vector.broadcast %46 : vector<1x8xf32> to vector<8x8xf32>
    %48 = arith.subf %42, %47 : vector<8x8xf32>
    %49 = arith.mulf %48, %48 : vector<8x8xf32>
    %cst_28 = arith.constant dense<0.000000e+00> : vector<8xf32>
    %50 = vector.multi_reduction <add>, %49, %cst_28 [0] : vector<8x8xf32> to vector<8xf32>
    %51 = vector.shape_cast %50 : vector<8xf32> to vector<1x8xf32>
    %cst_29 = arith.constant 1.250000e-01 : f32
    %52 = vector.broadcast %cst_29 : f32 to vector<1x8xf32>
    %53 = arith.mulf %51, %52 : vector<1x8xf32>
    %cst_30 = arith.constant 9.99999974E-6 : f32
    %54 = vector.broadcast %cst_30 : f32 to vector<1x8xf32>
    %55 = arith.addf %53, %54 : vector<1x8xf32>
    %56 = math.rsqrt %55 : vector<1x8xf32>
    %57 = vector.broadcast %56 : vector<1x8xf32> to vector<8x8xf32>
    %58 = arith.mulf %48, %57 : vector<8x8xf32>
    %59 = vector.broadcast %36 : vector<1x8xf32> to vector<8x8xf32>
    %60 = arith.mulf %58, %59 : vector<8x8xf32>
    %61 = vector.broadcast %37 : vector<1x8xf32> to vector<8x8xf32>
    %62 = arith.addf %60, %61 : vector<8x8xf32>
    %cst_31 = arith.constant 0.000000e+00 : f32
    %63 = vector.broadcast %cst_31 : f32 to vector<8x8xf32>
    %64 = arith.maximumf %62, %63 : vector<8x8xf32>
    %65 = arith.truncf %64 : vector<8x8xf32> to vector<8x8xbf16>
    %cst_32 = arith.constant dense<0.000000e+00> : vector<8x16xf32>
    %66 = tpu.matmul %65, %38, %cst_32 {dimension_numbers = #tpu.dot_dimension_numbers<[1], [0], [0], [1], [0, 0, 1, 1], [], []>} : vector<8x8xbf16>, vector<8x16xbf16>, vector<8x16xf32> -> vector<8x16xf32>
    %cst_33 = arith.constant dense<0.000000e+00> : vector<16xf32>
    %67 = vector.multi_reduction <add>, %66, %cst_33 [0] : vector<8x16xf32> to vector<16xf32>
    %68 = vector.shape_cast %67 : vector<16xf32> to vector<1x16xf32>
    %cst_34 = arith.constant 1.250000e-01 : f32
    %69 = vector.broadcast %cst_34 : f32 to vector<1x16xf32>
    %70 = arith.mulf %68, %69 : vector<1x16xf32>
    %71 = vector.broadcast %70 : vector<1x16xf32> to vector<8x16xf32>
    %72 = arith.subf %66, %71 : vector<8x16xf32>
    %73 = arith.mulf %72, %72 : vector<8x16xf32>
    %cst_35 = arith.constant dense<0.000000e+00> : vector<16xf32>
    %74 = vector.multi_reduction <add>, %73, %cst_35 [0] : vector<8x16xf32> to vector<16xf32>
    %75 = vector.shape_cast %74 : vector<16xf32> to vector<1x16xf32>
    %cst_36 = arith.constant 1.250000e-01 : f32
    %76 = vector.broadcast %cst_36 : f32 to vector<1x16xf32>
    %77 = arith.mulf %75, %76 : vector<1x16xf32>
    %cst_37 = arith.constant 9.99999974E-6 : f32
    %78 = vector.broadcast %cst_37 : f32 to vector<1x16xf32>
    %79 = arith.addf %77, %78 : vector<1x16xf32>
    %80 = math.rsqrt %79 : vector<1x16xf32>
    %81 = vector.broadcast %80 : vector<1x16xf32> to vector<8x16xf32>
    %82 = arith.mulf %72, %81 : vector<8x16xf32>
    %83 = vector.broadcast %39 : vector<1x16xf32> to vector<8x16xf32>
    %84 = arith.mulf %82, %83 : vector<8x16xf32>
    %85 = vector.broadcast %40 : vector<1x16xf32> to vector<8x16xf32>
    %86 = arith.addf %84, %85 : vector<8x16xf32>
    %cst_38 = arith.constant 0.000000e+00 : f32
    %87 = vector.broadcast %cst_38 : f32 to vector<8x16xf32>
    %88 = arith.maximumf %86, %87 : vector<8x16xf32>
    %c0_39 = arith.constant 0 : index
    %c0_40 = arith.constant 0 : index
    %89 = vector.load %arg22[%c0_39, %c0_40] : memref<8x16xf32, #tpu.memory_space<vmem>>, vector<8x16xf32>
    tpu.vector_store %arg22[%c0_39, %c0_40], %88 {strides = array<i32>} : memref<8x16xf32, #tpu.memory_space<vmem>>, vector<8x16xf32>,
    %c0_41 = arith.constant 0 : index
    %c0_42 = arith.constant 0 : index
    %90 = tpu.strided_load %arg22[%c0_41, %c0_42] {strides = array<i32: 2, 1>} : memref<8x16xf32, #tpu.memory_space<vmem>>, vector<4x16xf32>
    %c1 = arith.constant 1 : index
    %c0_43 = arith.constant 0 : index
    %91 = tpu.strided_load %arg22[%c1, %c0_43] {strides = array<i32: 2, 1>} : memref<8x16xf32, #tpu.memory_space<vmem>>, vector<4x16xf32>
    %92 = tpu.concatenate %90, %91 in 1 : vector<4x16xf32>, vector<4x16xf32> -> vector<4x32xf32>
    %c0_44 = arith.constant 0 : index
    %c0_45 = arith.constant 0 : index
    %93 = vector.load %arg11[%c0_44, %c0_45] : memref<32x16xbf16, #tpu.memory_space<vmem>>, vector<32x16xbf16>
    %c0_46 = arith.constant 0 : index
    %c0_47 = arith.constant 0 : index
    %94 = vector.load %arg12[%c0_46, %c0_47] : memref<1x16xf32, #tpu.memory_space<vmem>>, vector<1x16xf32>
    %c0_48 = arith.constant 0 : index
    %c0_49 = arith.constant 0 : index
    %95 = vector.load %arg13[%c0_48, %c0_49] : memref<1x16xf32, #tpu.memory_space<vmem>>, vector<1x16xf32>
    %c0_50 = arith.constant 0 : index
    %c0_51 = arith.constant 0 : index
    %96 = vector.load %arg14[%c0_50, %c0_51] : memref<16x32xbf16, #tpu.memory_space<vmem>>, vector<16x32xbf16>
    %c0_52 = arith.constant 0 : index
    %c0_53 = arith.constant 0 : index
    %97 = vector.load %arg15[%c0_52, %c0_53] : memref<1x32xf32, #tpu.memory_space<vmem>>, vector<1x32xf32>
    %c0_54 = arith.constant 0 : index
    %c0_55 = arith.constant 0 : index
    %98 = vector.load %arg16[%c0_54, %c0_55] : memref<1x32xf32, #tpu.memory_space<vmem>>, vector<1x32xf32>
    %99 = arith.truncf %92 : vector<4x32xf32> to vector<4x32xbf16>
    %cst_56 = arith.constant dense<0.000000e+00> : vector<4x16xf32>
    %100 = tpu.matmul %99, %93, %cst_56 {dimension_numbers = #tpu.dot_dimension_numbers<[1], [0], [0], [1], [0, 0, 1, 1], [], []>} : vector<4x32xbf16>, vector<32x16xbf16>, vector<4x16xf32> -> vector<4x16xf32>
    %cst_57 = arith.constant dense<0.000000e+00> : vector<16xf32>
    %101 = vector.multi_reduction <add>, %100, %cst_57 [0] : vector<4x16xf32> to vector<16xf32>
    %102 = vector.shape_cast %101 : vector<16xf32> to vector<1x16xf32>
    %cst_58 = arith.constant 2.500000e-01 : f32
    %103 = vector.broadcast %cst_58 : f32 to vector<1x16xf32>
    %104 = arith.mulf %102, %103 : vector<1x16xf32>
    %105 = vector.broadcast %104 : vector<1x16xf32> to vector<4x16xf32>
    %106 = arith.subf %100, %105 : vector<4x16xf32>
    %107 = arith.mulf %106, %106 : vector<4x16xf32>
    %cst_59 = arith.constant dense<0.000000e+00> : vector<16xf32>
    %108 = vector.multi_reduction <add>, %107, %cst_59 [0] : vector<4x16xf32> to vector<16xf32>
    %109 = vector.shape_cast %108 : vector<16xf32> to vector<1x16xf32>
    %cst_60 = arith.constant 2.500000e-01 : f32
    %110 = vector.broadcast %cst_60 : f32 to vector<1x16xf32>
    %111 = arith.mulf %109, %110 : vector<1x16xf32>
    %cst_61 = arith.constant 9.99999974E-6 : f32
    %112 = vector.broadcast %cst_61 : f32 to vector<1x16xf32>
    %113 = arith.addf %111, %112 : vector<1x16xf32>
    %114 = math.rsqrt %113 : vector<1x16xf32>
    %115 = vector.broadcast %114 : vector<1x16xf32> to vector<4x16xf32>
    %116 = arith.mulf %106, %115 : vector<4x16xf32>
    %117 = vector.broadcast %94 : vector<1x16xf32> to vector<4x16xf32>
    %118 = arith.mulf %116, %117 : vector<4x16xf32>
    %119 = vector.broadcast %95 : vector<1x16xf32> to vector<4x16xf32>
    %120 = arith.addf %118, %119 : vector<4x16xf32>
    %cst_62 = arith.constant 0.000000e+00 : f32
    %121 = vector.broadcast %cst_62 : f32 to vector<4x16xf32>
    %122 = arith.maximumf %120, %121 : vector<4x16xf32>
    %123 = arith.truncf %122 : vector<4x16xf32> to vector<4x16xbf16>
    %cst_63 = arith.constant dense<0.000000e+00> : vector<4x32xf32>
    %124 = tpu.matmul %123, %96, %cst_63 {dimension_numbers = #tpu.dot_dimension_numbers<[1], [0], [0], [1], [0, 0, 1, 1], [], []>} : vector<4x16xbf16>, vector<16x32xbf16>, vector<4x32xf32> -> vector<4x32xf32>
    %cst_64 = arith.constant dense<0.000000e+00> : vector<32xf32>
    %125 = vector.multi_reduction <add>, %124, %cst_64 [0] : vector<4x32xf32> to vector<32xf32>
    %126 = vector.shape_cast %125 : vector<32xf32> to vector<1x32xf32>
    %cst_65 = arith.constant 2.500000e-01 : f32
    %127 = vector.broadcast %cst_65 : f32 to vector<1x32xf32>
    %128 = arith.mulf %126, %127 : vector<1x32xf32>
    %129 = vector.broadcast %128 : vector<1x32xf32> to vector<4x32xf32>
    %130 = arith.subf %124, %129 : vector<4x32xf32>
    %131 = arith.mulf %130, %130 : vector<4x32xf32>
    %cst_66 = arith.constant dense<0.000000e+00> : vector<32xf32>
    %132 = vector.multi_reduction <add>, %131, %cst_66 [0] : vector<4x32xf32> to vector<32xf32>
    %133 = vector.shape_cast %132 : vector<32xf32> to vector<1x32xf32>
    %cst_67 = arith.constant 2.500000e-01 : f32
    %134 = vector.broadcast %cst_67 : f32 to vector<1x32xf32>
    %135 = arith.mulf %133, %134 : vector<1x32xf32>
    %cst_68 = arith.constant 9.99999974E-6 : f32
    %136 = vector.broadcast %cst_68 : f32 to vector<1x32xf32>
    %137 = arith.addf %135, %136 : vector<1x32xf32>
    %138 = math.rsqrt %137 : vector<1x32xf32>
    %139 = vector.broadcast %138 : vector<1x32xf32> to vector<4x32xf32>
    %140 = arith.mulf %130, %139 : vector<4x32xf32>
    %141 = vector.broadcast %97 : vector<1x32xf32> to vector<4x32xf32>
    %142 = arith.mulf %140, %141 : vector<4x32xf32>
    %143 = vector.broadcast %98 : vector<1x32xf32> to vector<4x32xf32>
    %144 = arith.addf %142, %143 : vector<4x32xf32>
    %cst_69 = arith.constant 0.000000e+00 : f32
    %145 = vector.broadcast %cst_69 : f32 to vector<4x32xf32>
    %146 = arith.maximumf %144, %145 : vector<4x32xf32>
    %c0_70 = arith.constant 0 : index
    %c0_71 = arith.constant 0 : index
    %147 = vector.load %arg17[%c0_70, %c0_71] : memref<32x128xbf16, #tpu.memory_space<vmem>>, vector<32x128xbf16>
    %c0_72 = arith.constant 0 : index
    %c0_73 = arith.constant 0 : index
    %148 = vector.load %arg18[%c0_72, %c0_73] : memref<1x128xf32, #tpu.memory_space<vmem>>, vector<1x128xf32>
    %c0_74 = arith.constant 0 : index
    %c0_75 = arith.constant 0 : index
    %149 = vector.load %arg19[%c0_74, %c0_75] : memref<1x128xf32, #tpu.memory_space<vmem>>, vector<1x128xf32>
    %c0_76 = arith.constant 0 : index
    %c0_77 = arith.constant 0 : index
    %150 = vector.load %arg20[%c0_76, %c0_77] : memref<1x1xf32, #tpu.memory_space<vmem>>, vector<1x1xf32>
    %151 = arith.truncf %146 : vector<4x32xf32> to vector<4x32xbf16>
    %cst_78 = arith.constant dense<0.000000e+00> : vector<4x128xf32>
    %152 = tpu.matmul %151, %147, %cst_78 {dimension_numbers = #tpu.dot_dimension_numbers<[1], [0], [0], [1], [0, 0, 1, 1], [], []>} : vector<4x32xbf16>, vector<32x128xbf16>, vector<4x128xf32> -> vector<4x128xf32>
    %153 = vector.broadcast %148 : vector<1x128xf32> to vector<4x128xf32>
    %154 = arith.addf %152, %153 : vector<4x128xf32>
    %cst_79 = arith.constant 0.000000e+00 : f32
    %155 = vector.broadcast %cst_79 : f32 to vector<4x128xf32>
    %156 = arith.maximumf %154, %155 : vector<4x128xf32>
    %157 = vector.broadcast %149 : vector<1x128xf32> to vector<4x128xf32>
    %158 = arith.mulf %156, %157 : vector<4x128xf32>
    %cst_80 = arith.constant dense<0.000000e+00> : vector<4xf32>
    %159 = vector.multi_reduction <add>, %158, %cst_80 [1] : vector<4x128xf32> to vector<4xf32>
    %160 = vector.shape_cast %159 : vector<4xf32> to vector<4x1xf32>
    %161 = vector.broadcast %150 : vector<1x1xf32> to vector<4x1xf32>
    %162 = arith.addf %160, %161 : vector<4x1xf32>
    %c0_81 = arith.constant 0 : index
    %c0_82 = arith.constant 0 : index
    %163 = vector.load %arg21[%c0_81, %c0_82] : memref<4x1xf32, #tpu.memory_space<vmem>>, vector<4x1xf32>
    tpu.vector_store %arg21[%c0_81, %c0_82], %162 {strides = array<i32>} : memref<4x1xf32, #tpu.memory_space<vmem>>, vector<4x1xf32>,
    return
  }
  func.func @transform_0(%arg0: i32) -> (i32, i32) {
    %c0_i32 = arith.constant 0 : i32
    %c0_i32_0 = arith.constant 0 : i32
    %c0_i32_1 = arith.constant 0 : i32
    return %c0_i32, %c0_i32_0 : i32, i32
  }
  func.func @transform_1(%arg0: i32) -> (i32, i32) {
    %c0_i32 = arith.constant 0 : i32
    %c0_i32_0 = arith.constant 0 : i32
    %c0_i32_1 = arith.constant 0 : i32
    return %c0_i32, %c0_i32_0 : i32, i32
  }
  func.func @transform_2(%arg0: i32) -> (i32, i32) {
    %c0_i32 = arith.constant 0 : i32
    %c0_i32_0 = arith.constant 0 : i32
    %c0_i32_1 = arith.constant 0 : i32
    return %c0_i32, %c0_i32_0 : i32, i32
  }
  func.func @transform_3(%arg0: i32) -> (i32, i32) {
    %c0_i32 = arith.constant 0 : i32
    %c0_i32_0 = arith.constant 0 : i32
    %c0_i32_1 = arith.constant 0 : i32
    return %c0_i32, %c0_i32_0 : i32, i32
  }
  func.func @transform_4(%arg0: i32) -> (i32, i32) {
    %c0_i32 = arith.constant 0 : i32
    %c0_i32_0 = arith.constant 0 : i32
    %c0_i32_1 = arith.constant 0 : i32
    return %c0_i32, %c0_i32_0 : i32, i32
  }
  func.func @transform_5(%arg0: i32) -> (i32, i32) {
    %c0_i32 = arith.constant 0 : i32
    %c0_i32_0 = arith.constant 0 : i32
    %c0_i32_1 = arith.constant 0 : i32
    return %c0_i32, %c0_i32_0 : i32, i32
  }
  func.func @transform_6(%arg0: i32) -> (i32, i32) {
    %c0_i32 = arith.constant 0 : i32
    %c0_i32_0 = arith.constant 0 : i32
    %c0_i32_1 = arith.constant 0 : i32
    return %c0_i32, %c0_i32_0 : i32, i32
  }
  func.func @transform_7(%arg0: i32) -> (i32, i32) {
    %c0_i32 = arith.constant 0 : i32
    %c0_i32_0 = arith.constant 0 : i32
    %c0_i32_1 = arith.constant 0 : i32
    return %c0_i32, %c0_i32_0 : i32, i32
  }
  func.func @transform_8(%arg0: i32) -> (i32, i32) {
    %c0_i32 = arith.constant 0 : i32
    %c0_i32_0 = arith.constant 0 : i32
    %c0_i32_1 = arith.constant 0 : i32
    return %c0_i32, %c0_i32_0 : i32, i32
  }
  func.func @transform_9(%arg0: i32) -> (i32, i32) {
    %c0_i32 = arith.constant 0 : i32
    %c0_i32_0 = arith.constant 0 : i32
    %c0_i32_1 = arith.constant 0 : i32
    return %c0_i32, %c0_i32_0 : i32, i32
  }
  func.func @transform_10(%arg0: i32) -> (i32, i32) {
    %c0_i32 = arith.constant 0 : i32
    %c0_i32_0 = arith.constant 0 : i32
    %c0_i32_1 = arith.constant 0 : i32
    return %c0_i32, %c0_i32_0 : i32, i32
  }
  func.func @transform_11(%arg0: i32) -> (i32, i32) {
    %c0_i32 = arith.constant 0 : i32
    %c0_i32_0 = arith.constant 0 : i32
    %c0_i32_1 = arith.constant 0 : i32
    return %c0_i32, %c0_i32_0 : i32, i32
  }
  func.func @transform_12(%arg0: i32) -> (i32, i32) {
    %c0_i32 = arith.constant 0 : i32
    %c0_i32_0 = arith.constant 0 : i32
    %c0_i32_1 = arith.constant 0 : i32
    return %c0_i32, %c0_i32_0 : i32, i32
  }
  func.func @transform_13(%arg0: i32) -> (i32, i32) {
    %c0_i32 = arith.constant 0 : i32
    %c0_i32_0 = arith.constant 0 : i32
    %c0_i32_1 = arith.constant 0 : i32
    return %c0_i32, %c0_i32_0 : i32, i32
  }
  func.func @transform_14(%arg0: i32) -> (i32, i32) {
    %c0_i32 = arith.constant 0 : i32
    %c0_i32_0 = arith.constant 0 : i32
    %c0_i32_1 = arith.constant 0 : i32
    return %c0_i32, %c0_i32_0 : i32, i32
  }
  func.func @transform_15(%arg0: i32) -> (i32, i32) {
    %c0_i32 = arith.constant 0 : i32
    %c0_i32_0 = arith.constant 0 : i32
    %c0_i32_1 = arith.constant 0 : i32
    return %c0_i32, %c0_i32_0 : i32, i32
  }
  func.func @transform_16(%arg0: i32) -> (i32, i32) {
    %c0_i32 = arith.constant 0 : i32
    %c0_i32_0 = arith.constant 0 : i32
    %c0_i32_1 = arith.constant 0 : i32
    return %c0_i32, %c0_i32_0 : i32, i32
  }
  func.func @transform_17(%arg0: i32) -> (i32, i32) {
    %c0_i32 = arith.constant 0 : i32
    %c0_i32_0 = arith.constant 0 : i32
    %c0_i32_1 = arith.constant 0 : i32
    return %c0_i32, %c0_i32_0 : i32, i32
  }
  func.func @transform_18(%arg0: i32) -> (i32, i32) {
    %c0_i32 = arith.constant 0 : i32
    %c0_i32_0 = arith.constant 0 : i32
    %c0_i32_1 = arith.constant 0 : i32
    return %c0_i32, %c0_i32_0 : i32, i32
  }
  func.func @transform_19(%arg0: i32) -> (i32, i32) {
    %c0_i32 = arith.constant 0 : i32
    %c0_i32_0 = arith.constant 0 : i32
    %c0_i32_1 = arith.constant 0 : i32
    return %c0_i32, %c0_i32_0 : i32, i32
  }
  func.func @transform_20(%arg0: i32) -> (i32, i32) {
    %c0_i32 = arith.constant 0 : i32
    %c0_i32_0 = arith.constant 0 : i32
    %c0_i32_1 = arith.constant 0 : i32
    return %c0_i32, %c0_i32_0 : i32, i32
  }
}

</mosaic_0001>

<llo_original>
// kernel: tpu_custom_call.1
$region0: #{tpu_custom_call.1}
  #allocation0 [shape = 'u32[]', space=smem, size = 0x4, offset = 0x4, fixed_abs, tag = 'smem constant byte address 0x4 - core index']
  #allocation1 [shape = 'u32[144,128]{1,0:T(1,128)}', space=vmem, size = 0x12000, scoped, tag = 'internal scratch']
  #allocation2 [shape = 'f32[8,16]{1,0:T(8,128)}', space=vmem, size = 0x1000, scoped, tag = 'scratch operand']
  #allocation3 [shape = 'f32[1,1]{1,0:T(1,128)S(1)}', space=vmem, size = 0x200, scoped, tag = 'scoped memory for tpu_custom_call.1']
  %s0 = inlined_call_operand.vmem [shape: bf16[8,32], index: 0, kind: input, shape index: {}]
  %s1 = inlined_call_operand.vmem [shape: bf16[32,16], index: 1, kind: input, shape index: {}]
  %s2 = inlined_call_operand.vmem [shape: f32[1,16], index: 2, kind: input, shape index: {}]
  %s3 = inlined_call_operand.vmem [shape: f32[1,16], index: 3, kind: input, shape index: {}]
  %s4 = inlined_call_operand.vmem [shape: bf16[16,8], index: 4, kind: input, shape index: {}]
  %s5 = inlined_call_operand.vmem [shape: f32[1,8], index: 5, kind: input, shape index: {}]
  %s6 = inlined_call_operand.vmem [shape: f32[1,8], index: 6, kind: input, shape index: {}]
  %s7 = inlined_call_operand.vmem [shape: bf16[8,16], index: 7, kind: input, shape index: {}]
  %s8 = inlined_call_operand.vmem [shape: f32[1,16], index: 8, kind: input, shape index: {}]
  %s9 = inlined_call_operand.vmem [shape: f32[1,16], index: 9, kind: input, shape index: {}]
  %s10 = inlined_call_operand.vmem [shape: bf16[32,16], index: 10, kind: input, shape index: {}]
  %s11 = inlined_call_operand.vmem [shape: f32[1,16], index: 11, kind: input, shape index: {}]
  %s12 = inlined_call_operand.vmem [shape: f32[1,16], index: 12, kind: input, shape index: {}]
  %s13 = inlined_call_operand.vmem [shape: bf16[16,32], index: 13, kind: input, shape index: {}]
  %s14 = inlined_call_operand.vmem [shape: f32[1,32], index: 14, kind: input, shape index: {}]
  %s15 = inlined_call_operand.vmem [shape: f32[1,32], index: 15, kind: input, shape index: {}]
  %s16 = inlined_call_operand.vmem [shape: bf16[32,128], index: 16, kind: input, shape index: {}]
  %s17 = inlined_call_operand.vmem [shape: f32[1,128], index: 17, kind: input, shape index: {}]
  %s18 = inlined_call_operand.vmem [shape: f32[1,128], index: 18, kind: input, shape index: {}]
  %s19 = inlined_call_operand.<no memory space> [shape: f32[1,1], index: 19, kind: input, shape index: {}]
  %s20 = inlined_call_operand.vmem [shape: f32[4,1], index: 20, kind: output, shape index: {}]
  %s21 = sld [smem:[#allocation0]]
  $region90: #{tpu_custom_call.1} parent=0
    _
  %s23 = ssub.s32 1, %s21
  %s24 = scalar_select 0, %s23, %s21
  %v25 = vstv %s19
  %26 = vst [vmem:[#allocation3] sm:$0x1] %v25
  // Predicated region
  $region2: #{tpu_custom_call.1} parent=0 // pred_check
    _
  $region3: #{tpu_custom_call.1} parent=0 // pred_check_branch
    %28 = sbr.rel (0) target = $region5
  $region4: #{tpu_custom_call.1} parent=0 // pred_region
    _
  $region5: #{tpu_custom_call.1} parent=0 // pred_fallthru
    _
  // Predicated region
  $region6: #{tpu_custom_call.1} parent=0 // pred_check
    _
  $region7: #{tpu_custom_call.1} parent=0 // pred_check_branch
    %30 = sbr.rel (0) target = $region9
  $region8: #{tpu_custom_call.1} parent=0 // pred_region
    _
  $region9: #{tpu_custom_call.1} parent=0 // pred_fallthru
    _
  // Predicated region
  $region10: #{tpu_custom_call.1} parent=0 // pred_check
    _
  $region11: #{tpu_custom_call.1} parent=0 // pred_check_branch
    %32 = sbr.rel (0) target = $region13
  $region12: #{tpu_custom_call.1} parent=0 // pred_region
    _
  $region13: #{tpu_custom_call.1} parent=0 // pred_fallthru
    _
  // Predicated region
  $region14: #{tpu_custom_call.1} parent=0 // pred_check
    _
  $region15: #{tpu_custom_call.1} parent=0 // pred_check_branch
    %34 = sbr.rel (0) target = $region17
  $region16: #{tpu_custom_call.1} parent=0 // pred_region
    _
  $region17: #{tpu_custom_call.1} parent=0 // pred_fallthru
    _
  // Predicated region
  $region18: #{tpu_custom_call.1} parent=0 // pred_check
    _
  $region19: #{tpu_custom_call.1} parent=0 // pred_check_branch
    %36 = sbr.rel (0) target = $region21
  $region20: #{tpu_custom_call.1} parent=0 // pred_region
    _
  $region21: #{tpu_custom_call.1} parent=0 // pred_fallthru
    _
  // Predicated region
  $region22: #{tpu_custom_call.1} parent=0 // pred_check
    _
  $region23: #{tpu_custom_call.1} parent=0 // pred_check_branch
    %38 = sbr.rel (0) target = $region25
  $region24: #{tpu_custom_call.1} parent=0 // pred_region
    _
  $region25: #{tpu_custom_call.1} parent=0 // pred_fallthru
    _
  // Predicated region
  $region26: #{tpu_custom_call.1} parent=0 // pred_check
    _
  $region27: #{tpu_custom_call.1} parent=0 // pred_check_branch
    %40 = sbr.rel (0) target = $region29
  $region28: #{tpu_custom_call.1} parent=0 // pred_region
    _
  $region29: #{tpu_custom_call.1} parent=0 // pred_fallthru
    _
  // Predicated region
  $region30: #{tpu_custom_call.1} parent=0 // pred_check
    _
  $region31: #{tpu_custom_call.1} parent=0 // pred_check_branch
    %42 = sbr.rel (0) target = $region33
  $region32: #{tpu_custom_call.1} parent=0 // pred_region
    _
  $region33: #{tpu_custom_call.1} parent=0 // pred_fallthru
    _
  // Predicated region
  $region34: #{tpu_custom_call.1} parent=0 // pred_check
    _
  $region35: #{tpu_custom_call.1} parent=0 // pred_check_branch
    %44 = sbr.rel (0) target = $region37
  $region36: #{tpu_custom_call.1} parent=0 // pred_region
    _
  $region37: #{tpu_custom_call.1} parent=0 // pred_fallthru
    _
  // Predicated region
  $region38: #{tpu_custom_call.1} parent=0 // pred_check
    _
  $region39: #{tpu_custom_call.1} parent=0 // pred_check_branch
    %46 = sbr.rel (0) target = $region41
  $region40: #{tpu_custom_call.1} parent=0 // pred_region
    _
  $region41: #{tpu_custom_call.1} parent=0 // pred_fallthru
    _
  // Predicated region
  $region42: #{tpu_custom_call.1} parent=0 // pred_check
    _
  $region43: #{tpu_custom_call.1} parent=0 // pred_check_branch
    %48 = sbr.rel (0) target = $region45
  $region44: #{tpu_custom_call.1} parent=0 // pred_region
    _
  $region45: #{tpu_custom_call.1} parent=0 // pred_fallthru
    _
  // Predicated region
  $region46: #{tpu_custom_call.1} parent=0 // pred_check
    _
  $region47: #{tpu_custom_call.1} parent=0 // pred_check_branch
    %50 = sbr.rel (0) target = $region49
  $region48: #{tpu_custom_call.1} parent=0 // pred_region
    _
  $region49: #{tpu_custom_call.1} parent=0 // pred_fallthru
    _
  // Predicated region
  $region50: #{tpu_custom_call.1} parent=0 // pred_check
    _
  $region51: #{tpu_custom_call.1} parent=0 // pred_check_branch
    %52 = sbr.rel (0) target = $region53
  $region52: #{tpu_custom_call.1} parent=0 // pred_region
    _
  $region53: #{tpu_custom_call.1} parent=0 // pred_fallthru
    _
  // Predicated region
  $region54: #{tpu_custom_call.1} parent=0 // pred_check
    _
  $region55: #{tpu_custom_call.1} parent=0 // pred_check_branch
    %54 = sbr.rel (0) target = $region57
  $region56: #{tpu_custom_call.1} parent=0 // pred_region
    _
  $region57: #{tpu_custom_call.1} parent=0 // pred_fallthru
    _
  // Predicated region
  $region58: #{tpu_custom_call.1} parent=0 // pred_check
    _
  $region59: #{tpu_custom_call.1} parent=0 // pred_check_branch
    %56 = sbr.rel (0) target = $region61
  $region60: #{tpu_custom_call.1} parent=0 // pred_region
    _
  $region61: #{tpu_custom_call.1} parent=0 // pred_fallthru
    _
  // Predicated region
  $region62: #{tpu_custom_call.1} parent=0 // pred_check
    _
  $region63: #{tpu_custom_call.1} parent=0 // pred_check_branch
    %58 = sbr.rel (0) target = $region65
  $region64: #{tpu_custom_call.1} parent=0 // pred_region
    _
  $region65: #{tpu_custom_call.1} parent=0 // pred_fallthru
    _
  // Predicated region
  $region66: #{tpu_custom_call.1} parent=0 // pred_check
    _
  $region67: #{tpu_custom_call.1} parent=0 // pred_check_branch
    %60 = sbr.rel (0) target = $region69
  $region68: #{tpu_custom_call.1} parent=0 // pred_region
    _
  $region69: #{tpu_custom_call.1} parent=0 // pred_fallthru
    _
  // Predicated region
  $region70: #{tpu_custom_call.1} parent=0 // pred_check
    _
  $region71: #{tpu_custom_call.1} parent=0 // pred_check_branch
    %62 = sbr.rel (0) target = $region73
  $region72: #{tpu_custom_call.1} parent=0 // pred_region
    _
  $region73: #{tpu_custom_call.1} parent=0 // pred_fallthru
    _
  // Predicated region
  $region74: #{tpu_custom_call.1} parent=0 // pred_check
    _
  $region75: #{tpu_custom_call.1} parent=0 // pred_check_branch
    %64 = sbr.rel (0) target = $region77
  $region76: #{tpu_custom_call.1} parent=0 // pred_region
    _
  $region77: #{tpu_custom_call.1} parent=0 // pred_fallthru
    _
  // Predicated region
  $region78: #{tpu_custom_call.1} parent=0 // pred_check
    _
  $region79: #{tpu_custom_call.1} parent=0 // pred_check_branch
    %66 = sbr.rel (0) target = $region81
  $region80: #{tpu_custom_call.1} parent=0 // pred_region
    _
  $region81: #{tpu_custom_call.1} parent=0 // pred_fallthru
    _
  %v68 = vld [vmem:[%s0] sm:$0xf]
  %v69 = vld [vmem:[%s1] sm:$0xf]
  %v70 = vld [vmem:[%s1 + $0x4] sm:$0xf]
  %v71 = vld [vmem:[%s1 + $0x8] sm:$0xf]
  %v72 = vld [vmem:[%s1 + $0xc] sm:$0xf]
  %v73 = vld [vmem:[%s2] sm:$0x1]
  %v74 = vld [vmem:[%s3] sm:$0x1]
  %v79 = vunpack.c.l.b16 %v69
  %v80 = vunpack.c.l.b16 %v70
  %v81 = vunpack.c.l.b16 %v71
  %v82 = vunpack.c.l.b16 %v72
  %v83 = vpack.c.b16 %v80, %v79
  %v84 = vpack.c.b16 %v82, %v81
  %vm87 = vcmask 261120
  %v89 = vsel %vm87, %v68, 0
  %91 = vmatprep.subr.bf16.mxu0 0
  %92 = vmatpush1.bf16.msra.mxu0 0
  %93 = vmatprep.subr.bf16.mxu0 0
  %94 = vmatpush1.bf16.msra.mxu0 0
  %95 = vmatprep.subr.bf16.mxu0 0
  %96 = vmatpush1.bf16.msra.mxu0 0
  %97 = vmatprep.subr.bf16.mxu0 0
  %98 = vmatpush1.bf16.msra.mxu0 0
  %99 = vmatprep.subr.bf16.mxu0 0
  %100 = vmatpush1.bf16.msra.mxu0 0
  %101 = vmatprep.subr.bf16.mxu0 0
  %102 = vmatpush1.bf16.msra.mxu0 0
  %103 = vmatprep.subr.bf16.mxu0 0
  %104 = vmatpush1.bf16.msra.mxu0 %v84
  %105 = vmatprep.subr.bf16.mxu0 0
  %106 = vmatpush1.bf16.msra.mxu0 %v83
  %107 = vmatprep.subr.bf16.mxu0 0
  %108 = vmatpush2.bf16.msra.mxu0 0
  %109 = vmatprep.subr.bf16.mxu0 0
  %110 = vmatpush2.bf16.msra.mxu0 0
  %111 = vmatprep.subr.bf16.mxu0 0
  %112 = vmatpush2.bf16.msra.mxu0 0
  %113 = vmatprep.subr.bf16.mxu0 0
  %114 = vmatpush2.bf16.msra.mxu0 0
  %115 = vmatprep.subr.bf16.mxu0 0
  %116 = vmatpush2.bf16.msra.mxu0 0
  %117 = vmatprep.subr.bf16.mxu0 0
  %118 = vmatpush2.bf16.msra.mxu0 0
  %119 = vmatprep.subr.bf16.mxu0 0
  %120 = vmatpush2.bf16.msra.mxu0 0
  %121 = vmatprep.subr.bf16.mxu0 0
  %122 = vmatpush2.bf16.msra.mxu0 0
  %123 = vmatprep.mubr.bf16.mxu0 0
  %124 = vmatmul.mubr.bf16.gmra.mxu0 %v89
  %v125 = vpop.f32.mrf.mxu0
  %v126 = vadd.f32 0.0, %v125
  %v127 = vpop.f32.mrf.mxu0
  %v128 = vpop.f32.mrf.mxu0
  %v129 = vpop.f32.mrf.mxu0
  %130 = vdwg.mxu0
  %vm131 = vcmask 130048
  %v132 = vsel %vm131, %v126, 0.0
  %v133 = vrot.slane %v132, 4
  %v134 = vadd.f32 %v132, %v133
  %v135 = vrot.slane %v134, 2
  %v136 = vadd.f32 %v134, %v135
  %v137 = vrot.slane %v136, 1
  %v138 = vadd.f32 %v136, %v137
  %140 = vrot.lane.b32.xlu0 %v138, 120
  %v141 = vpop.permute.xlu0 %140
  %v143 = vadd.f32 %v138, %v141
  %v144 = vmul.f32 %v143, 0.0625
  %146 = vrot.lane.b32.xlu0 %v144, 8
  %v147 = vpop.permute.xlu0 %146
  %vm149 = vcmask 64512
  %v150 = vsel %vm149, %v144, %v147
  %v151 = vlaneseq
  %v152 = vshrl.u32 %v151, 7
  %v153 = vsub.s32 0, %v152
  %v154 = vrot.slane %v150, %v153
  %v155 = vsub.f32 %v126, %v154
  %v156 = vmul.f32 %v155, %v155
  %v157 = vsel %vm131, %v156, 0.0
  %v158 = vrot.slane %v157, 4
  %v159 = vadd.f32 %v157, %v158
  %v160 = vrot.slane %v159, 2
  %v161 = vadd.f32 %v159, %v160
  %v162 = vrot.slane %v161, 1
  %v163 = vadd.f32 %v161, %v162
  %165 = vrot.lane.b32.xlu0 %v163, 120
  %v166 = vpop.permute.xlu0 %165
  %v168 = vadd.f32 %v163, %v166
  %v169 = vmul.f32 %v168, 0.0625
  %171 = vrot.lane.b32.xlu0 %v169, 8
  %v172 = vpop.permute.xlu0 %171
  %v174 = vsel %vm149, %v169, %v172
  %v175 = vadd.f32 %v174, 1e-05
  %v176 = vrsqrt.pop %v175
  %v177 = vlaneseq
  %v178 = vshrl.u32 %v177, 7
  %v179 = vsub.s32 0, %v178
  %v180 = vrot.slane %v176, %v179
  %v181 = vmul.f32 %v155, %v180
  %v183 = vlaneseq
  %v184 = vshrl.u32 %v183, 7
  %v185 = vsub.s32 0, %v184
  %v186 = vrot.slane %v73, %v185
  %v188 = vmul.f32 %v181, %v186
  %v190 = vlaneseq
  %v191 = vshrl.u32 %v190, 7
  %v192 = vsub.s32 0, %v191
  %v193 = vrot.slane %v74, %v192
  %v195 = vadd.f32 %v188, %v193
  %v196 = vmax.f32 %v195, 0.0
  %v197 = vld [vmem:[%s4] sm:$0xf]
  %v198 = vld [vmem:[%s4 + $0x4] sm:$0xf]
  %v199 = vld [vmem:[%s5] sm:$0x1]
  %v200 = vld [vmem:[%s6] sm:$0x1]
  %v201 = vld [vmem:[%s7] sm:$0xf]
  %v202 = vld [vmem:[%s8] sm:$0x1]
  %v203 = vld [vmem:[%s9] sm:$0x1]
  %v204 = vpack.c.bf16 %v196, %v196
  %v207 = vunpack.c.l.b16 %v197
  %v208 = vunpack.c.l.b16 %v198
  %v209 = vpack.c.b16 %v208, %v207
  %v212 = vsel %vm131, %v204, 0
  %214 = vmatprep.subr.bf16.mxu0 0
  %215 = vmatpush1.bf16.msra.mxu0 0
  %216 = vmatprep.subr.bf16.mxu0 0
  %217 = vmatpush1.bf16.msra.mxu0 0
  %218 = vmatprep.subr.bf16.mxu0 0
  %219 = vmatpush1.bf16.msra.mxu0 0
  %220 = vmatprep.subr.bf16.mxu0 0
  %221 = vmatpush1.bf16.msra.mxu0 0
  %222 = vmatprep.subr.bf16.mxu0 0
  %223 = vmatpush1.bf16.msra.mxu0 0
  %224 = vmatprep.subr.bf16.mxu0 0
  %225 = vmatpush1.bf16.msra.mxu0 0
  %226 = vmatprep.subr.bf16.mxu0 0
  %227 = vmatpush1.bf16.msra.mxu0 0
  %228 = vmatprep.subr.bf16.mxu0 0
  %229 = vmatpush1.bf16.msra.mxu0 %v209
  %230 = vmatprep.subr.bf16.mxu0 0
  %231 = vmatpush2.bf16.msra.mxu0 0
  %232 = vmatprep.subr.bf16.mxu0 0
  %233 = vmatpush2.bf16.msra.mxu0 0
  %234 = vmatprep.subr.bf16.mxu0 0
  %235 = vmatpush2.bf16.msra.mxu0 0
  %236 = vmatprep.subr.bf16.mxu0 0
  %237 = vmatpush2.bf16.msra.mxu0 0
  %238 = vmatprep.subr.bf16.mxu0 0
  %239 = vmatpush2.bf16.msra.mxu0 0
  %240 = vmatprep.subr.bf16.mxu0 0
  %241 = vmatpush2.bf16.msra.mxu0 0
  %242 = vmatprep.subr.bf16.mxu0 0
  %243 = vmatpush2.bf16.msra.mxu0 0
  %244 = vmatprep.subr.bf16.mxu0 0
  %245 = vmatpush2.bf16.msra.mxu0 0
  %246 = vmatprep.mubr.bf16.mxu0 0
  %247 = vmatmul.mubr.bf16.gmra.mxu0 %v212
  %v248 = vpop.f32.mrf.mxu0
  %v249 = vadd.f32 0.0, %v248
  %v250 = vpop.f32.mrf.mxu0
  %v251 = vpop.f32.mrf.mxu0
  %v252 = vpop.f32.mrf.mxu0
  %253 = vdwg.mxu0
  %v254 = vsel %vm149, %v249, 0.0
  %v255 = vrot.slane %v254, 4
  %v256 = vadd.f32 %v254, %v255
  %v257 = vrot.slane %v256, 2
  %v258 = vadd.f32 %v256, %v257
  %v259 = vrot.slane %v258, 1
  %v260 = vadd.f32 %v258, %v259
  %v261 = vmul.f32 %v260, 0.125
  %v262 = vsub.f32 %v249, %v261
  %v263 = vmul.f32 %v262, %v262
  %v264 = vsel %vm149, %v263, 0.0
  %v265 = vrot.slane %v264, 4
  %v266 = vadd.f32 %v264, %v265
  %v267 = vrot.slane %v266, 2
  %v268 = vadd.f32 %v266, %v267
  %v269 = vrot.slane %v268, 1
  %v270 = vadd.f32 %v268, %v269
  %v271 = vmul.f32 %v270, 0.125
  %v272 = vadd.f32 %v271, 1e-05
  %v273 = vrsqrt.pop %v272
  %v274 = vmul.f32 %v262, %v273
  %v276 = vlaneseq
  %v277 = vshrl.u32 %v276, 7
  %v278 = vsub.s32 0, %v277
  %v279 = vrot.slane %v199, %v278
  %v281 = vmul.f32 %v274, %v279
  %v283 = vlaneseq
  %v284 = vshrl.u32 %v283, 7
  %v285 = vsub.s32 0, %v284
  %v286 = vrot.slane %v200, %v285
  %v288 = vadd.f32 %v281, %v286
  %v289 = vmax.f32 %v288, 0.0
  %v290 = vpack.c.bf16 %v289, %v289
  %v292 = vsel %vm149, %v290, 0
  %vm294 = vcmask 1043456
  %v296 = vsel %vm294, %v201, 0
  %298 = vmatprep.subr.bf16.mxu0 0
  %299 = vmatpush1.bf16.msra.mxu0 0
  %300 = vmatprep.subr.bf16.mxu0 0
  %301 = vmatpush1.bf16.msra.mxu0 0
  %302 = vmatprep.subr.bf16.mxu0 0
  %303 = vmatpush1.bf16.msra.mxu0 0
  %304 = vmatprep.subr.bf16.mxu0 0
  %305 = vmatpush1.bf16.msra.mxu0 0
  %306 = vmatprep.subr.bf16.mxu0 0
  %307 = vmatpush1.bf16.msra.mxu0 0
  %308 = vmatprep.subr.bf16.mxu0 0
  %309 = vmatpush1.bf16.msra.mxu0 0
  %310 = vmatprep.subr.bf16.mxu0 0
  %311 = vmatpush1.bf16.msra.mxu0 0
  %312 = vmatprep.subr.bf16.mxu0 0
  %313 = vmatpush1.bf16.msra.mxu0 %v296
  %314 = vmatprep.subr.bf16.mxu0 0
  %315 = vmatpush2.bf16.msra.mxu0 0
  %316 = vmatprep.subr.bf16.mxu0 0
  %317 = vmatpush2.bf16.msra.mxu0 0
  %318 = vmatprep.subr.bf16.mxu0 0
  %319 = vmatpush2.bf16.msra.mxu0 0
  %320 = vmatprep.subr.bf16.mxu0 0
  %321 = vmatpush2.bf16.msra.mxu0 0
  %322 = vmatprep.subr.bf16.mxu0 0
  %323 = vmatpush2.bf16.msra.mxu0 0
  %324 = vmatprep.subr.bf16.mxu0 0
  %325 = vmatpush2.bf16.msra.mxu0 0
  %326 = vmatprep.subr.bf16.mxu0 0
  %327 = vmatpush2.bf16.msra.mxu0 0
  %328 = vmatprep.subr.bf16.mxu0 0
  %329 = vmatpush2.bf16.msra.mxu0 0
  %330 = vmatprep.mubr.bf16.mxu0 0
  %331 = vmatmul.mubr.bf16.gmra.mxu0 %v292
  %v332 = vpop.f32.mrf.mxu0
  %v333 = vadd.f32 0.0, %v332
  %v334 = vpop.f32.mrf.mxu0
  %v335 = vpop.f32.mrf.mxu0
  %v336 = vpop.f32.mrf.mxu0
  %337 = vdwg.mxu0
  %v338 = vsel %vm131, %v333, 0.0
  %v339 = vrot.slane %v338, 4
  %v340 = vadd.f32 %v338, %v339
  %v341 = vrot.slane %v340, 2
  %v342 = vadd.f32 %v340, %v341
  %v343 = vrot.slane %v342, 1
  %v344 = vadd.f32 %v342, %v343
  %v345 = vmul.f32 %v344, 0.125
  %v346 = vsub.f32 %v333, %v345
  %v347 = vmul.f32 %v346, %v346
  %v348 = vsel %vm131, %v347, 0.0
  %v349 = vrot.slane %v348, 4
  %v350 = vadd.f32 %v348, %v349
  %v351 = vrot.slane %v350, 2
  %v352 = vadd.f32 %v350, %v351
  %v353 = vrot.slane %v352, 1
  %v354 = vadd.f32 %v352, %v353
  %v355 = vmul.f32 %v354, 0.125
  %v356 = vadd.f32 %v355, 1e-05
  %v357 = vrsqrt.pop %v356
  %v358 = vmul.f32 %v346, %v357
  %v360 = vlaneseq
  %v361 = vshrl.u32 %v360, 7
  %v362 = vsub.s32 0, %v361
  %v363 = vrot.slane %v202, %v362
  %v365 = vmul.f32 %v358, %v363
  %v367 = vlaneseq
  %v368 = vshrl.u32 %v367, 7
  %v369 = vsub.s32 0, %v368
  %v370 = vrot.slane %v203, %v369
  %v372 = vadd.f32 %v365, %v370
  %v373 = vmax.f32 %v372, 0.0
  %374 = vst.msk [vmem:[#allocation2] sm:$0xff] %vm131, %v373
  %v375 = vld [vmem:[#allocation2] ss:$2 sm:$0xf]
  %s376 = scalar_lea.vmem [#allocation2], 1
  %v377 = vld [vmem:[%s376] ss:$2 sm:$0xf]
  %379 = vrot.lane.b32.xlu0 %v377, 16
  %v380 = vpop.permute.xlu0 %379
  %v382 = vsel %vm131, %v375, %v380
  %v383 = vld [vmem:[%s10] sm:$0xf]
  %v384 = vld [vmem:[%s10 + $0x4] sm:$0xf]
  %v385 = vld [vmem:[%s10 + $0x8] sm:$0xf]
  %v386 = vld [vmem:[%s10 + $0xc] sm:$0xf]
  %v387 = vld [vmem:[%s11] sm:$0x1]
  %v388 = vld [vmem:[%s12] sm:$0x1]
  %v389 = vld [vmem:[%s13] sm:$0xf]
  %v390 = vld [vmem:[%s13 + $0x4] sm:$0xf]
  %v391 = vld [vmem:[%s14] sm:$0x1]
  %v392 = vld [vmem:[%s15] sm:$0x1]
  %v393 = vpack.c.bf16 %v382, %v382
  %v398 = vunpack.c.l.b16 %v383
  %v399 = vunpack.c.l.b16 %v384
  %v400 = vunpack.c.l.b16 %v385
  %v401 = vunpack.c.l.b16 %v386
  %v402 = vpack.c.b16 %v399, %v398
  %v403 = vpack.c.b16 %v401, %v400
  %v407 = vsel %vm87, %v393, 0
  %409 = vmatprep.subr.bf16.mxu0 0
  %410 = vmatpush1.bf16.msra.mxu0 0
  %411 = vmatprep.subr.bf16.mxu0 0
  %412 = vmatpush1.bf16.msra.mxu0 0
  %413 = vmatprep.subr.bf16.mxu0 0
  %414 = vmatpush1.bf16.msra.mxu0 0
  %415 = vmatprep.subr.bf16.mxu0 0
  %416 = vmatpush1.bf16.msra.mxu0 0
  %417 = vmatprep.subr.bf16.mxu0 0
  %418 = vmatpush1.bf16.msra.mxu0 0
  %419 = vmatprep.subr.bf16.mxu0 0
  %420 = vmatpush1.bf16.msra.mxu0 0
  %421 = vmatprep.subr.bf16.mxu0 0
  %422 = vmatpush1.bf16.msra.mxu0 %v403
  %423 = vmatprep.subr.bf16.mxu0 0
  %424 = vmatpush1.bf16.msra.mxu0 %v402
  %425 = vmatprep.subr.bf16.mxu0 0
  %426 = vmatpush2.bf16.msra.mxu0 0
  %427 = vmatprep.subr.bf16.mxu0 0
  %428 = vmatpush2.bf16.msra.mxu0 0
  %429 = vmatprep.subr.bf16.mxu0 0
  %430 = vmatpush2.bf16.msra.mxu0 0
  %431 = vmatprep.subr.bf16.mxu0 0
  %432 = vmatpush2.bf16.msra.mxu0 0
  %433 = vmatprep.subr.bf16.mxu0 0
  %434 = vmatpush2.bf16.msra.mxu0 0
  %435 = vmatprep.subr.bf16.mxu0 0
  %436 = vmatpush2.bf16.msra.mxu0 0
  %437 = vmatprep.subr.bf16.mxu0 0
  %438 = vmatpush2.bf16.msra.mxu0 0
  %439 = vmatprep.subr.bf16.mxu0 0
  %440 = vmatpush2.bf16.msra.mxu0 0
  %441 = vmatprep.mubr.bf16.mxu0 0
  %442 = vmatmul.mubr.bf16.gmra.mxu0 %v407
  %v443 = vpop.f32.mrf.mxu0
  %v444 = vadd.f32 0.0, %v443
  %v445 = vpop.f32.mrf.mxu0
  %v446 = vpop.f32.mrf.mxu0
  %v447 = vpop.f32.mrf.mxu0
  %448 = vdwg.mxu0
  %vm449 = vcmask 125952
  %v450 = vsel %vm449, %v444, 0.0
  %v451 = vrot.slane %v450, 4
  %v452 = vadd.f32 %v450, %v451
  %v453 = vrot.slane %v452, 2
  %v454 = vadd.f32 %v452, %v453
  %v455 = vrot.slane %v454, 1
  %v456 = vadd.f32 %v454, %v455
  %v457 = vmul.f32 %v456, 0.25
  %v458 = vsub.f32 %v444, %v457
  %v459 = vmul.f32 %v458, %v458
  %v460 = vsel %vm449, %v459, 0.0
  %v461 = vrot.slane %v460, 4
  %v462 = vadd.f32 %v460, %v461
  %v463 = vrot.slane %v462, 2
  %v464 = vadd.f32 %v462, %v463
  %v465 = vrot.slane %v464, 1
  %v466 = vadd.f32 %v464, %v465
  %v467 = vmul.f32 %v466, 0.25
  %v468 = vadd.f32 %v467, 1e-05
  %v469 = vrsqrt.pop %v468
  %v470 = vmul.f32 %v458, %v469
  %v472 = vlaneseq
  %v473 = vshrl.u32 %v472, 7
  %v474 = vsub.s32 0, %v473
  %v475 = vrot.slane %v387, %v474
  %v477 = vmul.f32 %v470, %v475
  %v479 = vlaneseq
  %v480 = vshrl.u32 %v479, 7
  %v481 = vsub.s32 0, %v480
  %v482 = vrot.slane %v388, %v481
  %v484 = vadd.f32 %v477, %v482
  %v485 = vmax.f32 %v484, 0.0
  %v486 = vpack.c.bf16 %v485, %v485
  %v489 = vunpack.c.l.b16 %v389
  %v490 = vunpack.c.l.b16 %v390
  %v491 = vpack.c.b16 %v490, %v489
  %v494 = vsel %vm131, %v486, 0
  %496 = vmatprep.subr.bf16.mxu0 0
  %497 = vmatpush1.bf16.msra.mxu0 0
  %498 = vmatprep.subr.bf16.mxu0 0
  %499 = vmatpush1.bf16.msra.mxu0 0
  %500 = vmatprep.subr.bf16.mxu0 0
  %501 = vmatpush1.bf16.msra.mxu0 0
  %502 = vmatprep.subr.bf16.mxu0 0
  %503 = vmatpush1.bf16.msra.mxu0 0
  %504 = vmatprep.subr.bf16.mxu0 0
  %505 = vmatpush1.bf16.msra.mxu0 0
  %506 = vmatprep.subr.bf16.mxu0 0
  %507 = vmatpush1.bf16.msra.mxu0 0
  %508 = vmatprep.subr.bf16.mxu0 0
  %509 = vmatpush1.bf16.msra.mxu0 0
  %510 = vmatprep.subr.bf16.mxu0 0
  %511 = vmatpush1.bf16.msra.mxu0 %v491
  %512 = vmatprep.subr.bf16.mxu0 0
  %513 = vmatpush2.bf16.msra.mxu0 0
  %514 = vmatprep.subr.bf16.mxu0 0
  %515 = vmatpush2.bf16.msra.mxu0 0
  %516 = vmatprep.subr.bf16.mxu0 0
  %517 = vmatpush2.bf16.msra.mxu0 0
  %518 = vmatprep.subr.bf16.mxu0 0
  %519 = vmatpush2.bf16.msra.mxu0 0
  %520 = vmatprep.subr.bf16.mxu0 0
  %521 = vmatpush2.bf16.msra.mxu0 0
  %522 = vmatprep.subr.bf16.mxu0 0
  %523 = vmatpush2.bf16.msra.mxu0 0
  %524 = vmatprep.subr.bf16.mxu0 0
  %525 = vmatpush2.bf16.msra.mxu0 0
  %526 = vmatprep.subr.bf16.mxu0 0
  %527 = vmatpush2.bf16.msra.mxu0 0
  %528 = vmatprep.mubr.bf16.mxu0 0
  %529 = vmatmul.mubr.bf16.gmra.mxu0 %v494
  %v530 = vpop.f32.mrf.mxu0
  %v531 = vadd.f32 0.0, %v530
  %v532 = vpop.f32.mrf.mxu0
  %v533 = vpop.f32.mrf.mxu0
  %v534 = vpop.f32.mrf.mxu0
  %535 = vdwg.mxu0
  %vm536 = vcmask 257024
  %v537 = vsel %vm536, %v531, 0.0
  %v538 = vrot.slane %v537, 4
  %v539 = vadd.f32 %v537, %v538
  %v540 = vrot.slane %v539, 2
  %v541 = vadd.f32 %v539, %v540
  %v542 = vrot.slane %v541, 1
  %v543 = vadd.f32 %v541, %v542
  %v544 = vmul.f32 %v543, 0.25
  %v545 = vsub.f32 %v531, %v544
  %v546 = vmul.f32 %v545, %v545
  %v547 = vsel %vm536, %v546, 0.0
  %v548 = vrot.slane %v547, 4
  %v549 = vadd.f32 %v547, %v548
  %v550 = vrot.slane %v549, 2
  %v551 = vadd.f32 %v549, %v550
  %v552 = vrot.slane %v551, 1
  %v553 = vadd.f32 %v551, %v552
  %v554 = vmul.f32 %v553, 0.25
  %v555 = vadd.f32 %v554, 1e-05
  %v556 = vrsqrt.pop %v555
  %v557 = vmul.f32 %v545, %v556
  %v559 = vlaneseq
  %v560 = vshrl.u32 %v559, 7
  %v561 = vsub.s32 0, %v560
  %v562 = vrot.slane %v391, %v561
  %v564 = vmul.f32 %v557, %v562
  %v566 = vlaneseq
  %v567 = vshrl.u32 %v566, 7
  %v568 = vsub.s32 0, %v567
  %v569 = vrot.slane %v392, %v568
  %v571 = vadd.f32 %v564, %v569
  %v572 = vmax.f32 %v571, 0.0
  %v573 = vld [vmem:[%s16] sm:$0xf]
  %v574 = vld [vmem:[%s16 + $0x4] sm:$0xf]
  %v575 = vld [vmem:[%s16 + $0x8] sm:$0xf]
  %v576 = vld [vmem:[%s16 + $0xc] sm:$0xf]
  %v577 = vld [vmem:[%s17] sm:$0x1]
  %v578 = vld [vmem:[%s18] sm:$0x1]
  %v579 = vld [vmem:[#allocation3] sm:$0x1]
  %v580 = vpack.c.bf16 %v572, %v572
  %v582 = vlaneseq
  %v583 = vshrl.u32 %v582, 7
  %v584 = vsub.s32 0, %v583
  %v585 = vrot.slane %v577, %v584
  %v591 = vunpack.c.l.b16 %v573
  %v592 = vunpack.c.l.b16 %v574
  %v593 = vunpack.c.l.b16 %v575
  %v594 = vunpack.c.l.b16 %v576
  %v595 = vpack.c.b16 %v592, %v591
  %v596 = vpack.c.b16 %v594, %v593
  %v600 = vsel %vm87, %v580, 0
  %602 = vmatprep.subr.bf16.mxu0 0
  %603 = vmatpush1.bf16.msra.mxu0 0
  %604 = vmatprep.subr.bf16.mxu0 0
  %605 = vmatpush1.bf16.msra.mxu0 0
  %606 = vmatprep.subr.bf16.mxu0 0
  %607 = vmatpush1.bf16.msra.mxu0 0
  %608 = vmatprep.subr.bf16.mxu0 0
  %609 = vmatpush1.bf16.msra.mxu0 0
  %610 = vmatprep.subr.bf16.mxu0 0
  %611 = vmatpush1.bf16.msra.mxu0 0
  %612 = vmatprep.subr.bf16.mxu0 0
  %613 = vmatpush1.bf16.msra.mxu0 0
  %614 = vmatprep.subr.bf16.mxu0 0
  %615 = vmatpush1.bf16.msra.mxu0 %v596
  %616 = vmatprep.subr.bf16.mxu0 0
  %617 = vmatpush1.bf16.msra.mxu0 %v595
  %618 = vmatprep.subr.bf16.mxu0 0
  %619 = vmatpush2.bf16.msra.mxu0 0
  %620 = vmatprep.subr.bf16.mxu0 0
  %621 = vmatpush2.bf16.msra.mxu0 0
  %622 = vmatprep.subr.bf16.mxu0 0
  %623 = vmatpush2.bf16.msra.mxu0 0
  %624 = vmatprep.subr.bf16.mxu0 0
  %625 = vmatpush2.bf16.msra.mxu0 0
  %626 = vmatprep.subr.bf16.mxu0 0
  %627 = vmatpush2.bf16.msra.mxu0 0
  %628 = vmatprep.subr.bf16.mxu0 0
  %629 = vmatpush2.bf16.msra.mxu0 0
  %630 = vmatprep.subr.bf16.mxu0 0
  %631 = vmatpush2.bf16.msra.mxu0 0
  %632 = vmatprep.subr.bf16.mxu0 0
  %633 = vmatpush2.bf16.msra.mxu0 0
  %634 = vmatprep.mubr.bf16.mxu0 0
  %635 = vmatmul.mubr.bf16.gmra.mxu0 %v600
  %v636 = vpop.f32.mrf.mxu0
  %v637 = vadd.f32 %v585, %v636
  %v638 = vpop.f32.mrf.mxu0
  %v639 = vpop.f32.mrf.mxu0
  %v640 = vpop.f32.mrf.mxu0
  %641 = vdwg.mxu0
  %v642 = vmax.f32 %v637, 0.0
  %v644 = vlaneseq
  %v645 = vshrl.u32 %v644, 7
  %v646 = vsub.s32 0, %v645
  %v647 = vrot.slane %v578, %v646
  %v649 = vmul.f32 %v642, %v647
  %v650 = vsel %vm294, %v649, 0.0
  %651 = vadd.xlane.f32.xlu0 %v650
  %v652 = vpop.xlane.xlu0 %651
  %v654 = vlaneseq
  %v655 = vshrl.u32 %v654, 7
  %v656 = vsub.s32 0, %v655
  %v657 = vrot.slane %v579, %v656
  %v659 = vadd.f32 %v652, %v657
  %vm660 = vcmask 3072
  %661 = vst.msk [vmem:[%s20] sm:$0xf] %vm660, %v659
  // Predicated region
  $region82: #{tpu_custom_call.1} parent=0 // pred_check
    _
  $region83: #{tpu_custom_call.1} parent=0 // pred_check_branch
    %663 = sbr.rel (0) target = $region85
  $region84: #{tpu_custom_call.1} parent=0 // pred_region
    _
  $region85: #{tpu_custom_call.1} parent=0 // pred_fallthru
    _
  // Predicated region
  $region86: #{tpu_custom_call.1} parent=0 // pred_check
    _
  $region87: #{tpu_custom_call.1} parent=0 // pred_check_branch
    %665 = sbr.rel (0) target = $region89
  $region88: #{tpu_custom_call.1} parent=0 // pred_region
    _
  $region89: #{tpu_custom_call.1} parent=0 // pred_fallthru
    _

</llo_original>
